<compile_context>
chip_gen: v5e
topology: v5e:2x2
jax: 0.10.0
libtpu: 0.0.40
codegen_flags: <defaults>
</compile_context>

<pallas_src>
import jax
import jax.numpy as jnp
from jax import lax
from jax.experimental import pallas as pl
from jax.experimental.pallas import tpu as pltpu

BN_EPS = 1e-5
_LANE = 128
_SUBLANE = 8


def _ru(x, m):
    return (x + m - 1) // m * m


def make_fature_decoder(params):
    """Pre-pack the parameters ONCE; return a jitted forward(z, ge) -> (N, F)."""
    w1, b1, gamma, beta, w2, b2, w3a, w3b, b3 = [
        jnp.asarray(p, jnp.float32) for p in params
    ]
    E, F_ = w1.shape          # embd_dim, feature_dim
    N, I = w2.shape           # transpose_feature_dim (=batch), transpose_inter_dim
    G = w3b.shape[0]          # ge_dim
    Fp = _ru(F_, _LANE)       # lane-dense padded feature dim

    # ---------------- static parameter-slab layout (rows, Fp) ----------------
    o_w1 = 0                          # (E, F)                  -> rows [o_w1, o_w1+E)
    o_bn = o_w1 + _ru(E, _SUBLANE)    # rows b1 / gamma / beta  -> 3 rows (padded to 8)
    o_w2 = o_bn + _SUBLANE            # [w2^T | b2] : (I, N+1)  -> b2 lives at lane N
    o_w3 = o_w2 + _ru(I, _SUBLANE)    # [w3^T | b3] : (N, I+G+1)-> b3 lives at lane I+G
    p_rows = o_w3 + _ru(N, _SUBLANE)

    def _blk(x, rows):
        r, c = x.shape
        return jnp.pad(x, ((0, rows - r), (0, Fp - c)))

    w3t = jnp.concatenate([w3a, w3b], axis=0).T                   # (N, I+G)
    param_slab = jnp.concatenate(
        [
            _blk(w1, _ru(E, _SUBLANE)),                                    # (E, Fp)
            _blk(jnp.stack([b1, gamma, beta], axis=0), _SUBLANE),          # (8, Fp)
            _blk(jnp.concatenate([w2.T, b2[:, None]], axis=1),
                 _ru(I, _SUBLANE)),                                        # (I, Fp)
            _blk(jnp.concatenate([w3t, b3[:, None]], axis=1),
                 _ru(N, _SUBLANE)),                                        # (N, Fp)
        ],
        axis=0,
    )                                                              # built exactly once
    param_slab = jax.device_put(param_slab)

    # ---------------- per-call data-slab layout (rows, Fp) ----------------
    o_z = 0                           # z padded to (8, Fp), lane-dense load
    o_ge = _ru(N, _SUBLANE)           # ge^T padded to (G, Fp)
    d_rows = o_ge + _ru(G, _SUBLANE)

    # ---------------- kernel ----------------
    def kernel(d_ref, p_ref, out_ref, cat_ref):
        # decoder: Linear(E->F) + BatchNorm1d (training batch stats) + ReLU,
        # BN folded into one scale/shift FMA, stats computed in one pass.
        zt = d_ref[o_z:o_z + N, 0:E]                              # (N, E)
        w1v = p_ref[o_w1:o_w1 + E, :]                             # (E, Fp)
        bn = p_ref[o_bn:o_bn + 3, :]                              # (3, Fp)
        b1v, gammav, betav = bn[0:1], bn[1:2], bn[2:3]

        # NOTE: default MXU precision already matches the f32 reference to <1e-4
        # here; pass precision=lax.Precision.HIGHEST to the dots if bit parity
        # with PyTorch float32 Linear layers is required.
        h = jnp.dot(zt, w1v, preferred_element_type=jnp.float32) + b1v     # (N, Fp)
        s1 = jnp.sum(h, axis=0, keepdims=True)
        s2 = jnp.sum(h * h, axis=0, keepdims=True)
        mean = s1 * (1.0 / N)
        var = s2 * (1.0 / N) - mean * mean
        scale = gammav * lax.rsqrt(var + BN_EPS)                  # rsqrt -> EUP slot
        shift = betav - mean * scale
        h = jnp.maximum(h * scale + shift, 0.0)                   # (N, Fp)

        # transposer, computed transpose-free in (I, F) orientation:
        #   t'[i, f] = relu(sum_n W2[n, i] * h[n, f] + b2[i])
        w2t = p_ref[o_w2:o_w2 + I, 0:N]                           # (I, N)
        b2c = p_ref[o_w2:o_w2 + I, N:N + 1]                       # (I, 1)
        t = jnp.maximum(
            jnp.dot(w2t, h, preferred_element_type=jnp.float32) + b2c, 0.0)  # (I, Fp)

        # combine_decoder + final .T, fused into ONE MXU dot:
        #   out[n, f] = relu( ([w3a; w3b]^T @ [t'; ge^T])[n, f] + b3[n] )
        cat_ref[0:I, :] = t                                       # rows 0:I   <- t'
        cat_ref[I:I + G, :] = d_ref[o_ge:o_ge + G, :]             # rows I:I+G <- ge^T
        w3tv = p_ref[o_w3:o_w3 + N, 0:I + G]                      # (N, I+G)
        b3c = p_ref[o_w3:o_w3 + N, I + G:I + G + 1]               # (N, 1)
        out = jnp.dot(w3tv, cat_ref[...],
                      preferred_element_type=jnp.float32) + b3c
        out_ref[...] = jnp.maximum(out, 0.0).astype(out_ref.dtype)  # lane-dense store

    vmem = pl.BlockSpec(memory_space=pltpu.MemorySpace.VMEM)
    cost = pl.CostEstimate(
        flops=2 * Fp * (N * E + I * N + N * (I + G)) + 12 * N * Fp,
        transcendentals=Fp,                                        # rsqrt
        bytes_accessed=4 * (d_rows * Fp + p_rows * Fp + N * Fp),
    )
    fwd_call = pl.pallas_call(
        kernel,
        out_shape=jax.ShapeDtypeStruct((N, Fp), jnp.float32),
        in_specs=[vmem, vmem],
        out_specs=vmem,
        scratch_shapes=[pltpu.VMEM((I + G, Fp), jnp.float32)],
        compiler_params=pltpu.CompilerParams(
            # data slab has a tiny pad/transpose/concat producer -> allow XLA to
            # fuse it into the operand; the param slab is a resident constant.
            allow_input_fusion=[True, False]),
        cost_estimate=cost,
    )

    def forward(z, ge):
        # Per-call work is just assembling the small (d_rows, Fp) data slab.
        zf = jnp.asarray(z, jnp.float32)
        gef = jnp.asarray(ge, jnp.float32)
        z_blk = jnp.pad(zf, ((0, _ru(N, _SUBLANE) - N), (0, Fp - E)))
        ge_blk = jnp.pad(gef.T, ((0, _ru(G, _SUBLANE) - G), (0, Fp - F_)))
        data_slab = jnp.concatenate([z_blk, ge_blk], axis=0)
        out_padded = fwd_call(data_slab, param_slab)
        # Columns >= F are don't-care; consumers that accept the lane-padded
        # (N, Fp) slab can skip this slice entirely.
        return out_padded[:, :F_]

    return jax.jit(forward)


def reference_forward(z, ge, params):
    w1, b1, gamma, beta, w2, b2, w3a, w3b, b3 = params
    h = z @ w1 + b1
    mean = h.mean(axis=0, keepdims=True)
    var = ((h - mean) ** 2).mean(axis=0, keepdims=True)
    h = (h - mean) / jnp.sqrt(var + BN_EPS) * gamma + beta
    h = jnp.maximum(h, 0.0)
    t = jnp.maximum(h.T @ w2 + b2, 0.0)
    c = jnp.maximum(t @ w3a + ge @ w3b + b3, 0.0)
    return c.T


if __name__ == "__main__":
    # Shapes consistent with the module:
    #   feature_dim F=64, embd_dim E=32, transpose_feature_dim = batch N=8,
    #   transpose_inter_dim I=16, ge_dim G=16.  (inter_dim unused when cd=True)
    N, E, F_, I, G = 8, 32, 64, 16, 16

    key = jax.random.PRNGKey(0)
    ks = jax.random.split(key, 10)

    z = jax.random.normal(ks[0], (N, E), jnp.float32)
    ge = jax.random.normal(ks[1], (F_, G), jnp.float32)

    # Deterministic synthetic parameters (Linear weights stored as (in, out)).
    w1 = jax.random.normal(ks[2], (E, F_), jnp.float32) * 0.1
    b1 = jax.random.normal(ks[3], (F_,), jnp.float32) * 0.1
    gamma = 1.0 + 0.1 * jax.random.normal(ks[4], (F_,), jnp.float32)
    beta = 0.1 * jax.random.normal(ks[5], (F_,), jnp.float32)
    w2 = jax.random.normal(ks[6], (N, I), jnp.float32) * 0.1
    b2 = jax.random.normal(ks[7], (I,), jnp.float32) * 0.1
    w3 = jax.random.normal(ks[8], (I + G, N), jnp.float32) * 0.1   # Linear(I+G -> N)
    b3 = jax.random.normal(ks[9], (N,), jnp.float32) * 0.1
    w3a, w3b = w3[:I], w3[I:]

    params = (w1, b1, gamma, beta, w2, b2, w3a, w3b, b3)

    fwd = make_fature_decoder(params)       # parameter slab packed once, here
    out = jax.block_until_ready(fwd(z, ge))

    ref = reference_forward(z, ge, params)
    assert out.shape == (N, F_)
    assert jnp.allclose(out, ref, atol=1e-4, rtol=1e-4), "mismatch vs reference"

    print("KERNEL_OK")
</pallas_src>

<mosaic_0001>
module attributes {stable_mosaic.version = 11 : i64} {
  func.func @kernel(%arg0: memref<24x128xf32, #tpu.memory_space<vmem>>, %arg1: memref<64x128xf32, #tpu.memory_space<vmem>>, %arg2: memref<8x128xf32, #tpu.memory_space<vmem>>, %arg3: memref<32x128xf32, #tpu.memory_space<vmem>>) attributes {dimension_semantics = [], scalar_prefetch = 0 : i64, scratch_operands = 1 : i64, tpu.core_type = #tpu.core_type<tc>} {
    %c0 = arith.constant 0 : index
    %c0_0 = arith.constant 0 : index
    %0 = vector.load %arg0[%c0, %c0_0] : memref<24x128xf32, #tpu.memory_space<vmem>>, vector<8x32xf32>
    %c0_1 = arith.constant 0 : index
    %c0_2 = arith.constant 0 : index
    %1 = vector.load %arg1[%c0_1, %c0_2] : memref<64x128xf32, #tpu.memory_space<vmem>>, vector<32x128xf32>
    %c32 = arith.constant 32 : index
    %c0_3 = arith.constant 0 : index
    %2 = vector.load %arg1[%c32, %c0_3] : memref<64x128xf32, #tpu.memory_space<vmem>>, vector<3x128xf32>
    %3 = vector.extract_strided_slice %2 {offsets = [0, 0], sizes = [1, 128], strides = [1, 1]} : vector<3x128xf32> to vector<1x128xf32>
    %4 = vector.extract_strided_slice %2 {offsets = [1, 0], sizes = [1, 128], strides = [1, 1]} : vector<3x128xf32> to vector<1x128xf32>
    %5 = vector.extract_strided_slice %2 {offsets = [2, 0], sizes = [1, 128], strides = [1, 1]} : vector<3x128xf32> to vector<1x128xf32>
    %cst = arith.constant dense<0.000000e+00> : vector<8x128xf32>
    %6 = tpu.matmul %0, %1, %cst {dimension_numbers = #tpu.dot_dimension_numbers<[1], [0], [0], [1], [0, 0, 1, 1], [], []>} : vector<8x32xf32>, vector<32x128xf32>, vector<8x128xf32> -> vector<8x128xf32>
    %7 = vector.broadcast %3 : vector<1x128xf32> to vector<8x128xf32>
    %8 = arith.addf %6, %7 : vector<8x128xf32>
    %cst_4 = arith.constant dense<0.000000e+00> : vector<128xf32>
    %9 = vector.multi_reduction <add>, %8, %cst_4 [0] : vector<8x128xf32> to vector<128xf32>
    %10 = vector.shape_cast %9 : vector<128xf32> to vector<1x128xf32>
    %11 = arith.mulf %8, %8 : vector<8x128xf32>
    %cst_5 = arith.constant dense<0.000000e+00> : vector<128xf32>
    %12 = vector.multi_reduction <add>, %11, %cst_5 [0] : vector<8x128xf32> to vector<128xf32>
    %13 = vector.shape_cast %12 : vector<128xf32> to vector<1x128xf32>
    %cst_6 = arith.constant 1.250000e-01 : f32
    %14 = vector.broadcast %cst_6 : f32 to vector<1x128xf32>
    %15 = arith.mulf %10, %14 : vector<1x128xf32>
    %cst_7 = arith.constant 1.250000e-01 : f32
    %16 = vector.broadcast %cst_7 : f32 to vector<1x128xf32>
    %17 = arith.mulf %13, %16 : vector<1x128xf32>
    %18 = arith.mulf %15, %15 : vector<1x128xf32>
    %19 = arith.subf %17, %18 : vector<1x128xf32>
    %cst_8 = arith.constant 9.99999974E-6 : f32
    %20 = vector.broadcast %cst_8 : f32 to vector<1x128xf32>
    %21 = arith.addf %19, %20 : vector<1x128xf32>
    %22 = math.rsqrt %21 : vector<1x128xf32>
    %23 = arith.mulf %4, %22 : vector<1x128xf32>
    %24 = arith.mulf %15, %23 : vector<1x128xf32>
    %25 = arith.subf %5, %24 : vector<1x128xf32>
    %26 = vector.broadcast %23 : vector<1x128xf32> to vector<8x128xf32>
    %27 = arith.mulf %8, %26 : vector<8x128xf32>
    %28 = vector.broadcast %25 : vector<1x128xf32> to vector<8x128xf32>
    %29 = arith.addf %27, %28 : vector<8x128xf32>
    %cst_9 = arith.constant 0.000000e+00 : f32
    %30 = vector.broadcast %cst_9 : f32 to vector<8x128xf32>
    %31 = arith.maximumf %29, %30 : vector<8x128xf32>
    %c40 = arith.constant 40 : index
    %c0_10 = arith.constant 0 : index
    %32 = vector.load %arg1[%c40, %c0_10] : memref<64x128xf32, #tpu.memory_space<vmem>>, vector<16x8xf32>
    %c40_11 = arith.constant 40 : index
    %c8 = arith.constant 8 : index
    %33 = vector.load %arg1[%c40_11, %c8] : memref<64x128xf32, #tpu.memory_space<vmem>>, vector<16x1xf32>
    %cst_12 = arith.constant dense<0.000000e+00> : vector<16x128xf32>
    %34 = tpu.matmul %32, %31, %cst_12 {dimension_numbers = #tpu.dot_dimension_numbers<[1], [0], [0], [1], [0, 0, 1, 1], [], []>} : vector<16x8xf32>, vector<8x128xf32>, vector<16x128xf32> -> vector<16x128xf32>
    %35 = vector.broadcast %33 : vector<16x1xf32> to vector<16x128xf32>
    %36 = arith.addf %34, %35 : vector<16x128xf32>
    %cst_13 = arith.constant 0.000000e+00 : f32
    %37 = vector.broadcast %cst_13 : f32 to vector<16x128xf32>
    %38 = arith.maximumf %36, %37 : vector<16x128xf32>
    %c0_14 = arith.constant 0 : index
    %c0_15 = arith.constant 0 : index
    %39 = vector.load %arg3[%c0_14, %c0_15] : memref<32x128xf32, #tpu.memory_space<vmem>>, vector<16x128xf32>
    tpu.vector_store %arg3[%c0_14, %c0_15], %38 {strides = array<i32>} : memref<32x128xf32, #tpu.memory_space<vmem>>, vector<16x128xf32>,
    %c8_16 = arith.constant 8 : index
    %c0_17 = arith.constant 0 : index
    %40 = vector.load %arg0[%c8_16, %c0_17] : memref<24x128xf32, #tpu.memory_space<vmem>>, vector<16x128xf32>
    %c16 = arith.constant 16 : index
    %c0_18 = arith.constant 0 : index
    %41 = vector.load %arg3[%c16, %c0_18] : memref<32x128xf32, #tpu.memory_space<vmem>>, vector<16x128xf32>
    tpu.vector_store %arg3[%c16, %c0_18], %40 {strides = array<i32>} : memref<32x128xf32, #tpu.memory_space<vmem>>, vector<16x128xf32>,
    %c56 = arith.constant 56 : index
    %c0_19 = arith.constant 0 : index
    %42 = vector.load %arg1[%c56, %c0_19] : memref<64x128xf32, #tpu.memory_space<vmem>>, vector<8x32xf32>
    %c56_20 = arith.constant 56 : index
    %c32_21 = arith.constant 32 : index
    %43 = vector.load %arg1[%c56_20, %c32_21] : memref<64x128xf32, #tpu.memory_space<vmem>>, vector<8x1xf32>
    %c0_22 = arith.constant 0 : index
    %c0_23 = arith.constant 0 : index
    %44 = vector.load %arg3[%c0_22, %c0_23] : memref<32x128xf32, #tpu.memory_space<vmem>>, vector<32x128xf32>
    %cst_24 = arith.constant dense<0.000000e+00> : vector<8x128xf32>
    %45 = tpu.matmul %42, %44, %cst_24 {dimension_numbers = #tpu.dot_dimension_numbers<[1], [0], [0], [1], [0, 0, 1, 1], [], []>} : vector<8x32xf32>, vector<32x128xf32>, vector<8x128xf32> -> vector<8x128xf32>
    %46 = vector.broadcast %43 : vector<8x1xf32> to vector<8x128xf32>
    %47 = arith.addf %45, %46 : vector<8x128xf32>
    %cst_25 = arith.constant 0.000000e+00 : f32
    %48 = vector.broadcast %cst_25 : f32 to vector<8x128xf32>
    %49 = arith.maximumf %47, %48 : vector<8x128xf32>
    %c0_26 = arith.constant 0 : index
    %c0_27 = arith.constant 0 : index
    %50 = vector.load %arg2[%c0_26, %c0_27] : memref<8x128xf32, #tpu.memory_space<vmem>>, vector<8x128xf32>
    tpu.vector_store %arg2[%c0_26, %c0_27], %49 {strides = array<i32>} : memref<8x128xf32, #tpu.memory_space<vmem>>, vector<8x128xf32>,
    return
  }
}

</mosaic_0001>

<llo_original>
// kernel: forward.2
$region0: #{forward.2}
  #allocation0 [shape = 'u32[]', space=smem, size = 0x4, offset = 0x4, fixed_abs, tag = 'smem constant byte address 0x4 - core index']
  #allocation1 [shape = 'u32[72,128]{1,0:T(1,128)}', space=vmem, size = 0x9000, scoped, tag = 'internal scratch']
  #allocation2 [shape = 'f32[32,128]{1,0:T(8,128)}', space=vmem, size = 0x4000, scoped, tag = 'scratch operand']
  #allocation3 [shape = 'u32[2048]{0}', space=vmem, size = 0x2000, scoped, tag = 'scoped memory for forward.2']
  #allocation4 [shape = 'u32[2048]{0}', space=vmem, size = 0x2000, scoped, tag = 'scoped memory for forward.2']
  #allocation5 [shape = 'u32[2048]{0}', space=vmem, size = 0x2000, scoped, tag = 'scoped memory for forward.2']
  #allocation6 [shape = 'u32[2048]{0}', space=vmem, size = 0x2000, scoped, tag = 'scoped memory for forward.2']
  #allocation7 [shape = 'u32[2048]{0}', space=vmem, size = 0x2000, scoped, tag = 'scoped memory for forward.2']
  #allocation8 [shape = 'u32[2048]{0}', space=vmem, size = 0x2000, scoped, tag = 'scoped memory for forward.2']
  #allocation9 [shape = 'u32[2048]{0}', space=vmem, size = 0x2000, scoped, tag = 'scoped memory for forward.2']
  #allocation10 [shape = 'u32[2048]{0}', space=vmem, size = 0x2000, scoped, tag = 'scoped memory for forward.2']
  #allocation11 [shape = 'u32[2048]{0}', space=vmem, size = 0x2000, scoped, tag = 'scoped memory for forward.2']
  #allocation12 [shape = 'u32[2048]{0}', space=vmem, size = 0x2000, scoped, tag = 'scoped memory for forward.2']
  %s0 = inlined_call_operand.hbm [shape: f32[64,128], index: 0, kind: input, shape index: {}]
  %s1 = inlined_call_operand.hbm [shape: f32[16,64], index: 1, kind: input, shape index: {}]
  %s2 = inlined_call_operand.<no memory space> [shape: f32[], index: 2, kind: input, shape index: {}]
  %s3 = inlined_call_operand.hbm [shape: f32[8,32], index: 3, kind: input, shape index: {}]
  %s4 = inlined_call_operand.<no memory space> [shape: f32[], index: 4, kind: input, shape index: {}]
  %s5 = inlined_call_operand.<no memory space> [shape: s32[], index: 5, kind: input, shape index: {}]
  %s6 = inlined_call_operand.hbm [shape: f32[8,128], index: 6, kind: output, shape index: {}]
  %s7 = sld [smem:[#allocation0]]
  $region34: #{forward.2} parent=0
    _
  %s9 = ssub.s32 1, %s7
  %s10 = scalar_select 0, %s9, %s7
  %v11 = vstv %s2
  %v12 = vstv %s2
  %v13 = vstv %s4
  %v14 = vstv %s5
  $region1: #{forward.2} parent=0
    #allocation13 [shape = 'u8[12288]{0}', space=vmem, size = 0x3000, scoped, tag = 'operand span for operand 1']
    #allocation14 [shape = 's32[1]{0}', space=sflag, size = 0x4, scoped, tag = 'scoped memory for forward.2']
    #allocation15 [shape = 's32[1]{0}', space=sflag, size = 0x4, scoped, tag = 'scoped memory for forward.2']
    #allocation16 [shape = 'u8[4096]{0}', space=vmem, size = 0x1000, scoped, tag = 'operand span for operand 3']
    #allocation17 [shape = 's32[1]{0}', space=sflag, size = 0x4, scoped, tag = 'scoped memory for forward.2']
    #allocation18 [shape = 'u8[32768]{0}', space=vmem, size = 0x8000, scoped, tag = 'input window, operand 1, single buffered']
    #allocation19 [shape = 'u8[4096]{0}', space=vmem, size = 0x1000, scoped, tag = 'output window, operand 0, single buffered']
    #allocation20 [shape = 'u8[12288]{0}', space=vmem, size = 0x3000, dematerialized = true, scoped, tag = 'FusionAdapter Buffer %select_maximum_fusion.1 = f32[24,128]{1,0:T(8,128)} fusion(%param_1.17, %param_2.10, %param_3.9, %param_4.10, %param_5.10), kind=kLoop, calls=%fused_computation.clone.clone, metadata={op_name="jit(forward)/concatenate" stack_frame_id=10}']
    %15 = vsyncpa [#allocation14], 0
    %16 = vsyncpa [#allocation17], 0
    %17 = vsyncpa [#allocation15], 0
    // Predicated region
    $region2: #{forward.2} parent=1 // pred_check
      _
    $region3: #{forward.2} parent=1 // pred_check_branch
      %19 = sbr.rel (0) target = $region5
    $region4: #{forward.2} parent=1 // pred_region
      %21 = vsyncadd [#allocation14], 128
      %s22 = scalar_lea.vmem [#allocation13], 8
      %s23 = sshll.u32 %s1, 4
      %s24 = int_to_ptr.hbm [resolvable:$true] %s23
      %s25 = sshll.u32 %s22, 4
      %s26 = int_to_ptr.vmem [resolvable:$true] %s25
      %31 = dma.hbm_to_vmem [thread:$0]  %s24, 256, %s26, [#allocation14], 128, 128, 8
    $region5: #{forward.2} parent=1 // pred_fallthru
      _
    // Predicated region
    $region6: #{forward.2} parent=1 // pred_check
      _
    $region7: #{forward.2} parent=1 // pred_check_branch
      %33 = sbr.rel (0) target = $region9
    $region8: #{forward.2} parent=1 // pred_region
      %35 = vsyncadd [#allocation17], 0
      %s37 = sshll.u32 %s3, 4
      %s38 = int_to_ptr.hbm [resolvable:$true] %s37
      %s39 = sshll.u32 [#allocation16], 4
      %s40 = int_to_ptr.vmem [resolvable:$true] %s39
      %42 = dma.hbm_to_vmem [thread:$0]  %s38, 128, %s40, [#allocation17]
    $region9: #{forward.2} parent=1 // pred_fallthru
      _
    // Predicated region
    $region10: #{forward.2} parent=1 // pred_check
      _
    $region11: #{forward.2} parent=1 // pred_check_branch
      %44 = sbr.rel (0) target = $region13
    $region12: #{forward.2} parent=1 // pred_region
      %46 = vsyncadd [#allocation17], 0
      %s47 = sshll.u32 %s0, 4
      %s48 = int_to_ptr.hbm [resolvable:$true] %s47
      %s49 = sshll.u32 [#allocation18], 4
      %s50 = int_to_ptr.vmem [resolvable:$true] %s49
      %55 = dma.hbm_to_vmem [thread:$0]  %s48, 1024, %s50, [#allocation17], 128, 128, 8
    $region13: #{forward.2} parent=1 // pred_fallthru
      _
    // Predicated region
    $region14: #{forward.2} parent=1 // pred_check
      _
    $region15: #{forward.2} parent=1 // pred_check_branch
      %57 = sbr.rel (0) target = $region17
    $region16: #{forward.2} parent=1 // pred_region
      %59 = dma.done [#allocation14], 384
    $region17: #{forward.2} parent=1 // pred_fallthru
      _
    // Predicated region
    $region18: #{forward.2} parent=1 // pred_check
      _
    $region19: #{forward.2} parent=1 // pred_check_branch
      %61 = sbr.rel (0) target = $region21
    $region20: #{forward.2} parent=1 // pred_region
      %63 = dma.done [#allocation17], 128
    $region21: #{forward.2} parent=1 // pred_fallthru
      _
    // Predicated region
    $region22: #{forward.2} parent=1 // pred_check
      _
    $region23: #{forward.2} parent=1 // pred_check_branch
      %65 = sbr.rel (0) target = $region25
    $region24: #{forward.2} parent=1 // pred_region
      %67 = dma.done [#allocation17], 1024
    $region25: #{forward.2} parent=1 // pred_fallthru
      _
    %v68 = vld [vmem:[#allocation13] sm:$0xff]
    %v69 = vld [vmem:[#allocation16] sm:$0xff]
    %v70 = vlaneseq
    %v71 = vand.u32 %v70, 127
    %vm73 = vcmp.lt.s32.totalorder %v71, 32
    %v74 = vsel %vm73, %v69, %v12
    %v75 = vlaneseq
    %v76 = vshrl.u32 %v75, 7
    %79 = xla_tuple %v76, %v14
    %80 = xla_tuple %79
    %vm81 = vcmp.lt.s32.totalorder %v76, %v14
    %v82 = vsel %vm81, 1, 0
    %83 = xla_tuple %v82
    %84 = xla_tuple %v82, %v74, %v13
    %85 = xla_tuple %84
    %v86 = vsel %vm81, %v74, %v13
    %87 = xla_tuple %v86
    %v88 = vlaneseq
    %v89 = vshrl.u32 %v88, 7
    %92 = xla_tuple %v89, %v14
    %93 = xla_tuple %92
    %vm94 = vcmp.ge.s32.totalorder %v89, %v14
    %v95 = vsel %vm94, 1, 0
    %96 = xla_tuple %v95
    %97 = xla_tuple %v95, %v11, %v13
    %98 = xla_tuple %97
    %v99 = vsel %vm94, %v11, %v13
    %100 = xla_tuple %v99
    %101 = xla_tuple %v86, %v99
    %102 = xla_tuple %101
    %v103 = vmax.f32 %v86, %v99
    %104 = xla_tuple %v103
    %s106 = ssub.s32 256, 1
    %107 = vst [vmem:[#allocation20] sm:%s106] %v103
    %s108 = scalar_lea.vmem [#allocation13], 8
    %v109 = vld [vmem:[%s108] sm:$0xff]
    %v110 = vlaneseq
    %v111 = vand.u32 %v110, 127
    %vm113 = vcmp.lt.s32.totalorder %v111, 64
    %v114 = vsel %vm113, %v109, %v11
    %v115 = vlaneseq
    %v116 = vshrl.u32 %v115, 7
    %v118 = vadd.s32 %v116, 8
    %119 = xla_tuple %v118, %v14
    %120 = xla_tuple %119
    %vm121 = vcmp.lt.s32.totalorder %v118, %v14
    %v122 = vsel %vm121, 1, 0
    %123 = xla_tuple %v122
    %124 = xla_tuple %v122, %v12, %v13
    %125 = xla_tuple %124
    %v126 = vsel %vm121, %v12, %v13
    %127 = xla_tuple %v126
    %v128 = vlaneseq
    %v129 = vshrl.u32 %v128, 7
    %v131 = vadd.s32 %v129, 8
    %132 = xla_tuple %v131, %v14
    %133 = xla_tuple %132
    %vm134 = vcmp.ge.s32.totalorder %v131, %v14
    %v135 = vsel %vm134, 1, 0
    %136 = xla_tuple %v135
    %137 = xla_tuple %v135, %v114, %v13
    %138 = xla_tuple %137
    %v139 = vsel %vm134, %v114, %v13
    %140 = xla_tuple %v139
    %141 = xla_tuple %v126, %v139
    %142 = xla_tuple %141
    %v143 = vmax.f32 %v126, %v139
    %144 = xla_tuple %v143
    %s145 = scalar_lea.vmem [#allocation20], 8
    %s147 = ssub.s32 256, 1
    %148 = vst [vmem:[%s145] sm:%s147] %v143
    %s149 = scalar_lea.vmem [#allocation13], 16
    %v150 = vld [vmem:[%s149] sm:$0xff]
    %v151 = vlaneseq
    %v152 = vand.u32 %v151, 127
    %vm154 = vcmp.lt.s32.totalorder %v152, 64
    %v155 = vsel %vm154, %v150, %v11
    %v156 = vlaneseq
    %v157 = vshrl.u32 %v156, 7
    %v159 = vadd.s32 %v157, 16
    %160 = xla_tuple %v159, %v14
    %161 = xla_tuple %160
    %vm162 = vcmp.lt.s32.totalorder %v159, %v14
    %v163 = vsel %vm162, 1, 0
    %164 = xla_tuple %v163
    %165 = xla_tuple %v163, %v12, %v13
    %166 = xla_tuple %165
    %v167 = vsel %vm162, %v12, %v13
    %168 = xla_tuple %v167
    %v169 = vlaneseq
    %v170 = vshrl.u32 %v169, 7
    %v172 = vadd.s32 %v170, 16
    %173 = xla_tuple %v172, %v14
    %174 = xla_tuple %173
    %vm175 = vcmp.ge.s32.totalorder %v172, %v14
    %v176 = vsel %vm175, 1, 0
    %177 = xla_tuple %v176
    %178 = xla_tuple %v176, %v155, %v13
    %179 = xla_tuple %178
    %v180 = vsel %vm175, %v155, %v13
    %181 = xla_tuple %v180
    %182 = xla_tuple %v167, %v180
    %183 = xla_tuple %182
    %v184 = vmax.f32 %v167, %v180
    %185 = xla_tuple %v184
    %s186 = scalar_lea.vmem [#allocation20], 16
    %s188 = ssub.s32 256, 1
    %189 = vst [vmem:[%s186] sm:%s188] %v184
    %v190 = vld [vmem:[#allocation20] sm:$0xff]
    %v191 = vld [vmem:[#allocation18] sm:$0xff]
    %v192 = vld [vmem:[#allocation18 + $0x8] sm:$0xff]
    %v193 = vld [vmem:[#allocation18 + $0x10] sm:$0xff]
    %v194 = vld [vmem:[#allocation18 + $0x18] sm:$0xff]
    %v195 = vld [vmem:[#allocation18 + $0x20] sm:$0x7]
    %v196 = vperm.slane %v195, 0
    %vm197 = vcmask 261120
    %v199 = vsel %vm197, %v190, 0
    %201 = vmatpush.msra.mxu0 0.0
    %202 = vmatpush.msra.mxu0 0.0
    %203 = vmatpush.msra.mxu0 0.0
    %204 = vmatpush.msra.mxu0 0.0
    %205 = vmatpush.msra.mxu0 0.0
    %206 = vmatpush.msra.mxu0 0.0
    %207 = vmatpush.msra.mxu0 0.0
    %208 = vmatpush.msra.mxu0 0.0
    %209 = vmatpush.msra.mxu0 0.0
    %210 = vmatpush.msra.mxu0 0.0
    %211 = vmatpush.msra.mxu0 0.0
    %212 = vmatpush.msra.mxu0 0.0
    %213 = vmatpush.msra.mxu0 %v194
    %214 = vmatpush.msra.mxu0 %v193
    %215 = vmatpush.msra.mxu0 %v192
    %216 = vmatpush.msra.mxu0 %v191
    %217 = vmatmul.f32.gmra.mxu0 %v199
    %v218 = vpop.f32.mrf.mxu0
    %v219 = vadd.f32 %v196, %v218
    %220 = vdwg.mxu0
    %v221 = vrot.slane %v219, 4
    %v222 = vadd.f32 %v219, %v221
    %v223 = vrot.slane %v222, 2
    %v224 = vadd.f32 %v222, %v223
    %v225 = vrot.slane %v224, 1
    %v226 = vadd.f32 %v224, %v225
    %v227 = vmul.f32 %v219, %v219
    %v228 = vrot.slane %v227, 4
    %v229 = vadd.f32 %v227, %v228
    %v230 = vrot.slane %v229, 2
    %v231 = vadd.f32 %v229, %v230
    %v232 = vrot.slane %v231, 1
    %v233 = vadd.f32 %v231, %v232
    %v234 = vmul.f32 %v226, 0.125
    %v235 = vmul.f32 %v233, 0.125
    %v236 = vmul.f32 %v234, %v234
    %v237 = vsub.f32 %v235, %v236
    %v238 = vadd.f32 %v237, 1e-05
    %v239 = vrsqrt.pop %v238
    %v240 = vmul.f32 %v239, %v238
    %v241 = vmul.f32 %v240, %v239
    %v242 = vmul.f32 0.5, %v241
    %v243 = vsub.f32 1.5, %v242
    %v244 = vmul.f32 %v239, %v243
    %vm245 = vweird.f32 %v238
    %vm246 = vweird.f32 %v239
    %vm247 = vmor %vm245, %vm246
    %v248 = vsel %vm247, %v239, %v244
    %v249 = vmul.f32 %v195, %v248
    %v250 = vmul.f32 %v234, %v249
    %v252 = vrot.slane %v250, 7
    %v254 = vsub.f32 %v195, %v252
    %v255 = vperm.slane %v249, 1
    %v256 = vmul.f32 %v219, %v255
    %v257 = vperm.slane %v254, 2
    %v258 = vadd.f32 %v256, %v257
    %v259 = vmax.f32 %v258, 0.0
    %v260 = vld [vmem:[#allocation18 + $0x28] sm:$0xff]
    %v261 = vld [vmem:[#allocation18 + $0x30] sm:$0xff]
    %263 = vset.pattern.permute.xlu0 8
    %264 = vperm.xlu0 %263, %v260
    %v265 = vpop.permute.xlu0 %264
    %268 = vset.pattern.permute.xlu0 8
    %269 = vperm.xlu0 %268, %v261
    %v270 = vpop.permute.xlu0 %269
    %vm272 = vcmask 64512
    %v273 = vsel %vm272, %v260, 0
    %v275 = vsel %vm272, %v261, 0
    %277 = vmatpush.msra.mxu0 0.0
    %278 = vmatpush.msra.mxu0 0.0
    %279 = vmatpush.msra.mxu0 0.0
    %280 = vmatpush.msra.mxu0 0.0
    %281 = vmatpush.msra.mxu0 0.0
    %282 = vmatpush.msra.mxu0 0.0
    %283 = vmatpush.msra.mxu0 0.0
    %284 = vmatpush.msra.mxu0 0.0
    %285 = vmatpush.msra.mxu0 0.0
    %286 = vmatpush.msra.mxu0 0.0
    %287 = vmatpush.msra.mxu0 0.0
    %288 = vmatpush.msra.mxu0 0.0
    %289 = vmatpush.msra.mxu0 0.0
    %290 = vmatpush.msra.mxu0 0.0
    %291 = vmatpush.msra.mxu0 0.0
    %292 = vmatpush.msra.mxu0 %v259
    %293 = vmatmul.f32.gmra.mxu0 %v273
    %v294 = vpop.f32.mrf.mxu0
    %v295 = vadd.f32 %v265, %v294
    %296 = vmatmul.f32.gmra.mxu0 %v275
    %v297 = vpop.f32.mrf.mxu0
    %v298 = vadd.f32 %v270, %v297
    %299 = vdwg.mxu0
    %v300 = vmax.f32 %v295, 0.0
    %v301 = vmax.f32 %v298, 0.0
    %302 = vst [vmem:[#allocation2] sm:$0xff] %v300
    %303 = vst [vmem:[#allocation2 + $0x8] sm:$0xff] %v301
    %v304 = vld [vmem:[#allocation20 + $0x8] sm:$0xff]
    %v305 = vld [vmem:[#allocation20 + $0x10] sm:$0xff]
    %306 = vst [vmem:[#allocation2 + $0x10] sm:$0xff] %v304
    %307 = vst [vmem:[#allocation2 + $0x18] sm:$0xff] %v305
    %v308 = vld [vmem:[#allocation18 + $0x38] sm:$0xff]
    %v309 = vld [vmem:[#allocation2] sm:$0xff]
    %v310 = vld [vmem:[#allocation2 + $0x8] sm:$0xff]
    %v311 = vld [vmem:[#allocation2 + $0x10] sm:$0xff]
    %v312 = vld [vmem:[#allocation2 + $0x18] sm:$0xff]
    %314 = vset.pattern.permute.xlu0 32
    %315 = vperm.xlu0 %314, %v308
    %v316 = vpop.permute.xlu0 %315
    %v318 = vsel %vm197, %v308, 0
    %320 = vmatpush.msra.mxu0 0.0
    %321 = vmatpush.msra.mxu0 0.0
    %322 = vmatpush.msra.mxu0 0.0
    %323 = vmatpush.msra.mxu0 0.0
    %324 = vmatpush.msra.mxu0 0.0
    %325 = vmatpush.msra.mxu0 0.0
    %326 = vmatpush.msra.mxu0 0.0
    %327 = vmatpush.msra.mxu0 0.0
    %328 = vmatpush.msra.mxu0 0.0
    %329 = vmatpush.msra.mxu0 0.0
    %330 = vmatpush.msra.mxu0 0.0
    %331 = vmatpush.msra.mxu0 0.0
    %332 = vmatpush.msra.mxu0 %v312
    %333 = vmatpush.msra.mxu0 %v311
    %334 = vmatpush.msra.mxu0 %v310
    %335 = vmatpush.msra.mxu0 %v309
    %336 = vmatmul.f32.gmra.mxu0 %v318
    %v337 = vpop.f32.mrf.mxu0
    %v338 = vadd.f32 %v316, %v337
    %339 = vdwg.mxu0
    %v340 = vmax.f32 %v338, 0.0
    %341 = vst [vmem:[#allocation19] sm:$0xff] %v340
    // Predicated region
    $region26: #{forward.2} parent=1 // pred_check
      _
    $region27: #{forward.2} parent=1 // pred_check_branch
      %343 = sbr.rel (0) target = $region29
    $region28: #{forward.2} parent=1 // pred_region
      %345 = vsyncadd [#allocation15], 0
      %s347 = sshll.u32 [#allocation19], 4
      %s348 = int_to_ptr.vmem [resolvable:$true] %s347
      %s349 = sshll.u32 %s6, 4
      %s350 = int_to_ptr.hbm [resolvable:$true] %s349
      %352 = dma.vmem_to_hbm [thread:$0]  %s348, 128, %s350, [#allocation15]
    $region29: #{forward.2} parent=1 // pred_fallthru
      _
    // Predicated region
    $region30: #{forward.2} parent=1 // pred_check
      _
    $region31: #{forward.2} parent=1 // pred_check_branch
      %354 = sbr.rel (0) target = $region33
    $region32: #{forward.2} parent=1 // pred_region
      %356 = dma.done [#allocation15], 128
    $region33: #{forward.2} parent=1 // pred_fallthru
      _
    %357 = vsyncpa [#allocation14], 1
    %358 = vsyncpa [#allocation17], 1
    %359 = vsyncpa [#allocation15], 1

</llo_original>
